<compile_context>
chip_gen: v7x
topology: tpu7x:2x2x1
jax: 0.10.0
libtpu: 0.0.40
codegen_flags: <defaults>
</compile_context>

<pallas_src>
import functools

import jax
import jax.numpy as jnp
from jax.experimental import pallas as pl
from jax.experimental.pallas import tpu as pltpu


def _round_up(n, m):
    return ((n + m - 1) // m) * m


def _cdiv(a, b):
    return (a + b - 1) // b


@functools.lru_cache(maxsize=1)
def _tpu_generation_info():
    """Return (physical VMEM bytes, TensorCores per chip) for the local device."""
    vmem_bytes, n_tc = 64 << 20, 1          # conservative fallback
    try:
        kind = jax.devices()[0].device_kind.lower()
    except Exception:
        return vmem_bytes, n_tc
    if "v7" in kind or "7x" in kind:
        return 64 << 20, 2                  # v7x: 64 MiB VMEM per TC, 2 TCs/chip
    if any(g in kind for g in ("v4", "v5", "v6")):
        return 128 << 20, 1                 # v4/v5e/v6e: 128 MiB VMEM, 1 TC
    return vmem_bytes, n_tc


def _pick_batch_tile(B, D, H, *, tb_max, vmem_tile_budget, n_tc):
    """Pick batch tile TB (sublane/lane aligned) and the grid length."""
    # Conservative per-batch-row VMEM bytes: double-buffered f32 x tile,
    # in-kernel bf16 copy of x, f32/bf16 hidden activations, output row.
    per_row = 10 * D + 12 * H + 64
    tb_fit = max(256, (vmem_tile_budget // per_row) // 256 * 256)
    tb_sel = min(int(tb_max), tb_fit)
    if n_tc > 1 and B > 512:
        # Guarantee >= 2 grid steps so the "parallel" batch axis actually
        # shards across both v7x TensorCores instead of leaving one idle.
        tb_sel = min(tb_sel, _round_up(_cdiv(B, n_tc), 256))
    if tb_sel >= B:
        # Whole batch in one block: block dims == full array dims, so no
        # (8, 128) alignment constraints and no masked edge block.
        return B, 1
    tb_sel = max(256, (tb_sel // 256) * 256)   # multiple of 256 => 8- and 128-aligned
    return tb_sel, _cdiv(B, tb_sel)


def calib_kernel(x_ref, w1_ref, b1_ref, w2t_ref, bcal_ref, o_ref):
    # Layer 1 on the MXU. The f32 -> bf16 cast of the x tile happens here
    # (VPU work hidden under the DMA in this memory-bound regime); f32 accum.
    h1 = jnp.dot(x_ref[...].astype(jnp.bfloat16), w1_ref[...],
                 preferred_element_type=jnp.float32)
    h1 = jnp.maximum(h1 + b1_ref[...], 0.0)
    # Layer 2 has a single output unit. Computing it as a transposed-RHS MXU
    # matmul makes the result land as a lane-dense (8, TB) slab (row 0 is the
    # real logit row; rows 1..7 of w2' are zero padding), so the store is
    # unmasked lane-dense instead of TB/8 single-lane masked stores.
    #   logit[0, b] = sum_h w2'[0, h] * h1[b, h]
    logit8 = jax.lax.dot_general(
        w2t_ref[...], h1.astype(jnp.bfloat16),
        dimension_numbers=(((1,), (1,)), ((), ())),
        preferred_element_type=jnp.float32)                  # (8, TB)
    o_ref[...] = (logit8[0:1, :] + bcal_ref[0]).astype(o_ref.dtype)


@functools.partial(jax.jit, static_argnames=("tb",))
def calibrated_forward(x, w1, b1, w2, b2, alpha, beta, *, tb=8192):
    """alpha * mlp(x) + beta, fused into one Pallas kernel. Returns (B, 1)."""
    B, D = x.shape
    H = w1.shape[1]
    assert w1.shape == (D, H) and b1.shape == (1, H)
    assert w2.shape == (H, 1) and b2.shape == (1, 1)
    assert alpha.shape == (1,) and beta.shape == (1,)

    phys_vmem, n_tc = _tpu_generation_info()
    vmem_cap = int(0.75 * phys_vmem)        # ~48 MiB on v7x, ~96 MiB on v5e/v6e
    TB, n_blocks = _pick_batch_tile(
        B, D, H, tb_max=tb, vmem_tile_budget=vmem_cap // 2, n_tc=n_tc)

    # --- one-time parameter folding (parameters, not activations) ---
    # w2' = alpha * W2^T, padded to 8 sublane rows (rows 1..7 zero) so the
    # transposed-RHS matmul uses a native 8-sublane LHS tile.
    w2_row = (alpha[0] * w2[:, 0]).astype(jnp.bfloat16)                 # (H,)
    w2t8 = jnp.zeros((8, H), jnp.bfloat16).at[0, :].set(w2_row)         # (8, H)
    bcal = (alpha[0] * b2[0, 0] + beta[0]).astype(jnp.float32).reshape(1)

    w1_lo = w1.astype(jnp.bfloat16)         # resident weight: bf16 for the MXU
    b1_f32 = b1.astype(jnp.float32)

    # VMEM budget: double-buffered f32 x tiles + in-kernel intermediates +
    # resident weights, with margin; generation-aware cap.
    per_row = 10 * D + 12 * H + 64
    weight_bytes = D * H * 2 + H * 4 + 8 * H * 2 + 256
    need = per_row * TB + weight_bytes
    vmem_limit = int(min(max(2 * need, 32 << 20), vmem_cap))

    cost = pl.CostEstimate(
        flops=2 * B * D * H + 2 * 8 * B * H + 2 * B * H,
        transcendentals=0,
        bytes_accessed=B * D * 4 + D * H * 2 + H * 4 + 8 * H * 2 + 4 + B * 4,
    )

    out = pl.pallas_call(
        calib_kernel,
        out_shape=jax.ShapeDtypeStruct((1, B), jnp.float32),
        grid=(n_blocks,),
        in_specs=[
            pl.BlockSpec((TB, D), lambda i: (i, 0)),   # x f32 tile (pipelined)
            pl.BlockSpec((D, H), lambda i: (0, 0)),    # W1 bf16 (VMEM-resident)
            pl.BlockSpec((1, H), lambda i: (0, 0)),    # b1 f32
            pl.BlockSpec((8, H), lambda i: (0, 0)),    # alpha * W2^T (8 rows)
            pl.BlockSpec(memory_space=pltpu.SMEM),     # alpha*b2 + beta (scalar)
        ],
        out_specs=pl.BlockSpec((1, TB), lambda i: (0, i)),   # lane-dense output
        compiler_params=pltpu.CompilerParams(
            dimension_semantics=("parallel",),
            vmem_limit_bytes=vmem_limit,
        ),
        cost_estimate=cost,
    )(x, w1_lo, b1_f32, w2t8, bcal)

    # Layout plumbing only: (1, B) lane-dense slab -> module's (B, 1) output.
    return out.reshape(B, 1)


def reference_forward(x, w1, b1, w2, b2, alpha, beta, *, match_kernel=True):
    if match_kernel:
        # Same precision policy as the kernel: bf16 MXU matmuls, f32 accum,
        # alpha/beta/b2 folded into the second layer.
        h1 = jnp.dot(x.astype(jnp.bfloat16), w1.astype(jnp.bfloat16),
                     preferred_element_type=jnp.float32) + b1
        h1 = jnp.maximum(h1, 0.0)
        logit = jnp.dot(h1.astype(jnp.bfloat16),
                        (alpha[0] * w2).astype(jnp.bfloat16),
                        preferred_element_type=jnp.float32)
        return logit + (alpha[0] * b2[0, 0] + beta[0])
    h1 = jnp.maximum(x @ w1 + b1, 0.0)
    return alpha[0] * (h1 @ w2 + b2) + beta[0]


if __name__ == "__main__":
    key = jax.random.PRNGKey(0)
    D, H = 32, 32
    kx, kw1, kb1, kw2, kb2 = jax.random.split(key, 5)

    # Deterministic synthetic base-model parameters (no checkpoint load).
    w1 = jax.random.normal(kw1, (D, H), dtype=jnp.float32) * 0.1
    b1 = jax.random.normal(kb1, (1, H), dtype=jnp.float32) * 0.05
    w2 = jax.random.normal(kw2, (H, 1), dtype=jnp.float32) * 0.1
    b2 = jax.random.normal(kb2, (1, 1), dtype=jnp.float32) * 0.05

    # CalibrationModel parameters (module initializes alpha=1, beta=0; use
    # non-trivial "trained" values so the calibration affine is exercised).
    alpha = jnp.full((1,), 1.25, dtype=jnp.float32)
    beta = jnp.full((1,), -0.5, dtype=jnp.float32)

    # Small single-block case and a multi-block case with a ragged edge block
    # (forces the cdiv grid / dropped out-of-bounds writes path).
    for B, tb in ((16, 8192), (1000, 256)):
        x = jax.random.normal(jax.random.fold_in(kx, B), (B, D), dtype=jnp.float32)
        out = jax.block_until_ready(
            calibrated_forward(x, w1, b1, w2, b2, alpha, beta, tb=tb))
        assert out.shape == (B, 1)

        # Precision-matched reference (same bf16 matmul policy as the kernel).
        ref = reference_forward(x, w1, b1, w2, b2, alpha, beta, match_kernel=True)
        assert jnp.allclose(out, ref, atol=2e-3, rtol=2e-3), (
            B, float(jnp.max(jnp.abs(out - ref))))

        # Full-f32 semantic sanity check (loose tolerance for bf16 matmuls).
        ref32 = reference_forward(x, w1, b1, w2, b2, alpha, beta, match_kernel=False)
        assert jnp.allclose(out, ref32, atol=8e-2, rtol=8e-2), (
            B, float(jnp.max(jnp.abs(out - ref32))))

    print("KERNEL_OK")
</pallas_src>

<mosaic_0001>
module attributes {stable_mosaic.version = 11 : i64} {
  func.func @calib_kernel(%arg0: i32, %arg1: memref<16x32xf32, #tpu.memory_space<vmem>>, %arg2: memref<32x32xbf16, #tpu.memory_space<vmem>>, %arg3: memref<1x32xf32, #tpu.memory_space<vmem>>, %arg4: memref<8x32xbf16, #tpu.memory_space<vmem>>, %arg5: memref<1xf32, #tpu.memory_space<smem>>, %arg6: memref<1x16xf32, #tpu.memory_space<vmem>>) attributes {dimension_semantics = [#tpu.dimension_semantics<parallel>], iteration_bounds = array<i64: 1>, scalar_prefetch = 0 : i64, scratch_operands = 0 : i64, tpu.core_type = #tpu.core_type<tc>, window_params = [{transform_indices = @transform_0, window_bounds = array<i64: 16, 32>}, {pipeline_mode = #tpu.pipeline_mode<synchronous>, transform_indices = @transform_1, window_bounds = array<i64: 32, 32>}, {pipeline_mode = #tpu.pipeline_mode<synchronous>, transform_indices = @transform_2, window_bounds = array<i64: 1, 32>}, {pipeline_mode = #tpu.pipeline_mode<synchronous>, transform_indices = @transform_3, window_bounds = array<i64: 8, 32>}, {transform_indices = @transform_4, window_bounds = array<i64: 1>}, {transform_indices = @transform_5, window_bounds = array<i64: 1, 16>}]} {
    %c0 = arith.constant 0 : index
    %c0_0 = arith.constant 0 : index
    %0 = vector.load %arg1[%c0, %c0_0] : memref<16x32xf32, #tpu.memory_space<vmem>>, vector<16x32xf32>
    %1 = arith.truncf %0 : vector<16x32xf32> to vector<16x32xbf16>
    %c0_1 = arith.constant 0 : index
    %c0_2 = arith.constant 0 : index
    %2 = vector.load %arg2[%c0_1, %c0_2] : memref<32x32xbf16, #tpu.memory_space<vmem>>, vector<32x32xbf16>
    %cst = arith.constant dense<0.000000e+00> : vector<16x32xf32>
    %3 = tpu.matmul %1, %2, %cst {dimension_numbers = #tpu.dot_dimension_numbers<[1], [0], [0], [1], [0, 0, 1, 1], [], []>} : vector<16x32xbf16>, vector<32x32xbf16>, vector<16x32xf32> -> vector<16x32xf32>
    %c0_3 = arith.constant 0 : index
    %c0_4 = arith.constant 0 : index
    %4 = vector.load %arg3[%c0_3, %c0_4] : memref<1x32xf32, #tpu.memory_space<vmem>>, vector<1x32xf32>
    %5 = vector.broadcast %4 : vector<1x32xf32> to vector<16x32xf32>
    %6 = arith.addf %3, %5 : vector<16x32xf32>
    %cst_5 = arith.constant 0.000000e+00 : f32
    %7 = vector.broadcast %cst_5 : f32 to vector<16x32xf32>
    %8 = arith.maximumf %6, %7 : vector<16x32xf32>
    %c0_6 = arith.constant 0 : index
    %c0_7 = arith.constant 0 : index
    %9 = vector.load %arg4[%c0_6, %c0_7] : memref<8x32xbf16, #tpu.memory_space<vmem>>, vector<8x32xbf16>
    %10 = arith.truncf %8 : vector<16x32xf32> to vector<16x32xbf16>
    %cst_8 = arith.constant dense<0.000000e+00> : vector<8x16xf32>
    %11 = tpu.matmul %9, %10, %cst_8 {dimension_numbers = #tpu.dot_dimension_numbers<[1], [1], [0], [0], [0, 0, 1, 0], [], []>} : vector<8x32xbf16>, vector<16x32xbf16>, vector<8x16xf32> -> vector<8x16xf32>
    %12 = vector.extract_strided_slice %11 {offsets = [0, 0], sizes = [1, 16], strides = [1, 1]} : vector<8x16xf32> to vector<1x16xf32>
    %c0_9 = arith.constant 0 : index
    %13 = memref.load %arg5[%c0_9] : memref<1xf32, #tpu.memory_space<smem>>
    %14 = vector.broadcast %13 : f32 to vector<1x16xf32>
    %15 = arith.addf %12, %14 : vector<1x16xf32>
    %c0_10 = arith.constant 0 : index
    %c0_11 = arith.constant 0 : index
    %16 = vector.load %arg6[%c0_10, %c0_11] : memref<1x16xf32, #tpu.memory_space<vmem>>, vector<1x16xf32>
    tpu.vector_store %arg6[%c0_10, %c0_11], %15 {strides = array<i32>} : memref<1x16xf32, #tpu.memory_space<vmem>>, vector<1x16xf32>,
    return
  }
  func.func @transform_0(%arg0: i32) -> (i32, i32) {
    %c0_i32 = arith.constant 0 : i32
    %c0_i32_0 = arith.constant 0 : i32
    return %arg0, %c0_i32 : i32, i32
  }
  func.func @transform_1(%arg0: i32) -> (i32, i32) {
    %c0_i32 = arith.constant 0 : i32
    %c0_i32_0 = arith.constant 0 : i32
    %c0_i32_1 = arith.constant 0 : i32
    return %c0_i32, %c0_i32_0 : i32, i32
  }
  func.func @transform_2(%arg0: i32) -> (i32, i32) {
    %c0_i32 = arith.constant 0 : i32
    %c0_i32_0 = arith.constant 0 : i32
    %c0_i32_1 = arith.constant 0 : i32
    return %c0_i32, %c0_i32_0 : i32, i32
  }
  func.func @transform_3(%arg0: i32) -> (i32, i32) {
    %c0_i32 = arith.constant 0 : i32
    %c0_i32_0 = arith.constant 0 : i32
    %c0_i32_1 = arith.constant 0 : i32
    return %c0_i32, %c0_i32_0 : i32, i32
  }
  func.func @transform_4(%arg0: i32) -> i32 {
    %c0_i32 = arith.constant 0 : i32
    %c0_i32_0 = arith.constant 0 : i32
    return %c0_i32 : i32
  }
  func.func @transform_5(%arg0: i32) -> (i32, i32) {
    %c0_i32 = arith.constant 0 : i32
    %c0_i32_0 = arith.constant 0 : i32
    return %c0_i32, %arg0 : i32, i32
  }
}

</mosaic_0001>

<llo_original>
// kernel: calibrated_forward.1
$region0: #{calibrated_forward.1}
  #allocation0 [shape = 'u32[]', space=smem, size = 0x4, offset = 0x4, fixed_abs, tag = 'smem constant byte address 0x4 - core index']
  #allocation1 [shape = 'u32[144,128]{1,0:T(1,128)}', space=vmem, size = 0x12000, scoped, tag = 'internal scratch']
  #allocation2 [shape = 'f32[1]{0:T(128)S(6)}', space=smem, size = 0x200, scoped, tag = 'scoped memory for calibrated_forward.1']
  %s0 = inlined_call_operand.vmem [shape: f32[16,32], index: 0, kind: input, shape index: {}]
  %s1 = inlined_call_operand.vmem [shape: bf16[32,32], index: 1, kind: input, shape index: {}]
  %s2 = inlined_call_operand.vmem [shape: f32[1,32], index: 2, kind: input, shape index: {}]
  %s3 = inlined_call_operand.vmem [shape: bf16[8,32], index: 3, kind: input, shape index: {}]
  %s4 = inlined_call_operand.<no memory space> [shape: f32[1], index: 4, kind: input, shape index: {}]
  %s5 = inlined_call_operand.hbm [shape: f32[1,16], index: 5, kind: output, shape index: {}]
  %s6 = sld [smem:[#allocation0]]
  $region30: #{calibrated_forward.1} parent=0
    _
  %s8 = ssub.s32 1, %s6
  %s9 = scalar_select 0, %s8, %s6
  %10 = sst [smem:[#allocation2]] %s4
  $region1: #{calibrated_forward.1} parent=0
    #allocation3 [shape = 'u8[512]{0}', space=vmem, size = 0x400, scoped, tag = 'output window, operand 0, single buffered']
    #allocation4 [shape = 's32[1]{0}', space=sflag, size = 0x4, scoped, tag = 'scoped memory for calibrated_forward.1']
    %11 = vsyncpa [#allocation4], 0
    // Predicated region
    $region2: #{calibrated_forward.1} parent=1 // pred_check
      _
    $region3: #{calibrated_forward.1} parent=1 // pred_check_branch
      %13 = sbr.rel (0) target = $region5
    $region4: #{calibrated_forward.1} parent=1 // pred_region
      _
    $region5: #{calibrated_forward.1} parent=1 // pred_fallthru
      _
    // Predicated region
    $region6: #{calibrated_forward.1} parent=1 // pred_check
      _
    $region7: #{calibrated_forward.1} parent=1 // pred_check_branch
      %15 = sbr.rel (0) target = $region9
    $region8: #{calibrated_forward.1} parent=1 // pred_region
      _
    $region9: #{calibrated_forward.1} parent=1 // pred_fallthru
      _
    // Predicated region
    $region10: #{calibrated_forward.1} parent=1 // pred_check
      _
    $region11: #{calibrated_forward.1} parent=1 // pred_check_branch
      %17 = sbr.rel (0) target = $region13
    $region12: #{calibrated_forward.1} parent=1 // pred_region
      _
    $region13: #{calibrated_forward.1} parent=1 // pred_fallthru
      _
    // Predicated region
    $region14: #{calibrated_forward.1} parent=1 // pred_check
      _
    $region15: #{calibrated_forward.1} parent=1 // pred_check_branch
      %19 = sbr.rel (0) target = $region17
    $region16: #{calibrated_forward.1} parent=1 // pred_region
      _
    $region17: #{calibrated_forward.1} parent=1 // pred_fallthru
      _
    // Predicated region
    $region18: #{calibrated_forward.1} parent=1 // pred_check
      _
    $region19: #{calibrated_forward.1} parent=1 // pred_check_branch
      %21 = sbr.rel (0) target = $region21
    $region20: #{calibrated_forward.1} parent=1 // pred_region
      _
    $region21: #{calibrated_forward.1} parent=1 // pred_fallthru
      _
    %v23 = vld [vmem:[%s0] sm:$0xff]
    %v24 = vld [vmem:[%s0 + $0x8] sm:$0xff]
    %v25 = vpack.c.bf16 %v24, %v23
    %v26 = vld [vmem:[%s1] sm:$0xf]
    %v27 = vld [vmem:[%s1 + $0x4] sm:$0xf]
    %v28 = vld [vmem:[%s1 + $0x8] sm:$0xf]
    %v29 = vld [vmem:[%s1 + $0xc] sm:$0xf]
    %v30 = vld [vmem:[%s2] sm:$0x1]
    %v32 = vlaneseq
    %v33 = vshrl.u32 %v32, 7
    %v34 = vsub.s32 0, %v33
    %v35 = vrot.slane %v30, %v34
    %v41 = vunpack.c.l.b16 %v26
    %v42 = vunpack.c.l.b16 %v27
    %v43 = vunpack.c.l.b16 %v28
    %v44 = vunpack.c.l.b16 %v29
    %v45 = vpack.c.b16 %v42, %v41
    %v46 = vpack.c.b16 %v44, %v43
    %vm49 = vcmask 261120
    %v51 = vsel %vm49, %v25, 0
    %53 = vmatprep.subr.bf16.mxu0 0
    %54 = vmatpush1.bf16.msra.mxu0 %v45
    %55 = vmatprep.subr.bf16.mxu0 0
    %56 = vmatpush1.bf16.msra.mxu0 %v46
    %57 = vmatprep.subr.bf16.mxu0 0
    %58 = vmatpush1.bf16.msra.mxu0 0
    %59 = vmatprep.subr.bf16.mxu0 0
    %60 = vmatpush1.bf16.msra.mxu0 0
    %61 = vmatprep.subr.bf16.mxu0 0
    %62 = vmatpush1.bf16.msra.mxu0 0
    %63 = vmatprep.subr.bf16.mxu0 0
    %64 = vmatpush1.bf16.msra.mxu0 0
    %65 = vmatprep.subr.bf16.mxu0 0
    %66 = vmatpush1.bf16.msra.mxu0 0
    %67 = vmatprep.subr.bf16.mxu0 0
    %68 = vmatpush1.bf16.msra.mxu0 0
    %69 = vmatprep.subr.bf16.mxu0 0
    %70 = vmatpush1.bf16.msra.mxu0 0
    %71 = vmatprep.subr.bf16.mxu0 0
    %72 = vmatpush1.bf16.msra.mxu0 0
    %73 = vmatprep.subr.bf16.mxu0 0
    %74 = vmatpush1.bf16.msra.mxu0 0
    %75 = vmatprep.subr.bf16.mxu0 0
    %76 = vmatpush1.bf16.msra.mxu0 0
    %77 = vmatprep.subr.bf16.mxu0 0
    %78 = vmatpush1.bf16.msra.mxu0 0
    %79 = vmatprep.subr.bf16.mxu0 0
    %80 = vmatpush1.bf16.msra.mxu0 0
    %81 = vmatprep.subr.bf16.mxu0 0
    %82 = vmatpush1.bf16.msra.mxu0 0
    %83 = vmatprep.subr.bf16.mxu0 0
    %84 = vmatpush1.bf16.msra.mxu0 0
    %85 = vmatprep.mubr.bf16.mxu0 0
    %86 = vmatmul.mubr.bf16.gmra.mrb[0].mxu0 %v51
    %v87 = vpop.f32.mrb[0].mxu0
    %v88 = vadd.f32 %v35, %v87
    %v89 = vpop.f32.mrb[0].mxu0
    %v90 = vpop.f32.mrb[0].mxu0
    %v91 = vadd.f32 %v35, %v90
    %v92 = vpop.f32.mrb[0].mxu0
    %93 = vdwg.mxu0
    %v94 = vmax.f32 %v88, 0.0
    %v95 = vmax.f32 %v91, 0.0
    %v96 = vld [vmem:[%s3] sm:$0xf]
    %v97 = vpack.c.bf16 %v95, %v94
    %v99 = vsel %vm49, %v96, 0
    %v102 = vsel %vm49, %v97, 0
    %104 = vmatprep.subr.bf16.mxu0 0
    %105 = vmatpush1.bf16.xpose.msra.mxu0 %v102
    %106 = vmatprep.subr.bf16.mxu0 0
    %107 = vmatpush1.bf16.xpose.msra.mxu0 0
    %108 = vmatprep.subr.bf16.mxu0 0
    %109 = vmatpush1.bf16.xpose.msra.mxu0 0
    %110 = vmatprep.subr.bf16.mxu0 0
    %111 = vmatpush1.bf16.xpose.msra.mxu0 0
    %112 = vmatprep.subr.bf16.mxu0 0
    %113 = vmatpush1.bf16.xpose.msra.mxu0 0
    %114 = vmatprep.subr.bf16.mxu0 0
    %115 = vmatpush1.bf16.xpose.msra.mxu0 0
    %116 = vmatprep.subr.bf16.mxu0 0
    %117 = vmatpush1.bf16.xpose.msra.mxu0 0
    %118 = vmatprep.subr.bf16.mxu0 0
    %119 = vmatpush1.bf16.xpose.msra.mxu0 0
    %120 = vmatprep.subr.bf16.mxu0 0
    %121 = vmatpush1.bf16.xpose.msra.mxu0 0
    %122 = vmatprep.subr.bf16.mxu0 0
    %123 = vmatpush1.bf16.xpose.msra.mxu0 0
    %124 = vmatprep.subr.bf16.mxu0 0
    %125 = vmatpush1.bf16.xpose.msra.mxu0 0
    %126 = vmatprep.subr.bf16.mxu0 0
    %127 = vmatpush1.bf16.xpose.msra.mxu0 0
    %128 = vmatprep.subr.bf16.mxu0 0
    %129 = vmatpush1.bf16.xpose.msra.mxu0 0
    %130 = vmatprep.subr.bf16.mxu0 0
    %131 = vmatpush1.bf16.xpose.msra.mxu0 0
    %132 = vmatprep.subr.bf16.mxu0 0
    %133 = vmatpush1.bf16.xpose.msra.mxu0 0
    %134 = vmatprep.subr.bf16.mxu0 0
    %135 = vmatpush1.bf16.xpose.msra.mxu0 0
    %136 = vmatprep.mubr.bf16.mxu0 0
    %137 = vmatmul.mubr.bf16.gmra.mrb[0].mxu0 %v99
    %v138 = vpop.f32.mrb[0].mxu0
    %v139 = vadd.f32 0.0, %v138
    %v140 = vpop.f32.mrb[0].mxu0
    %v141 = vpop.f32.mrb[0].mxu0
    %v142 = vpop.f32.mrb[0].mxu0
    %143 = vdwg.mxu0
    %s144 = sld [smem:[#allocation2]]
    %v145 = vstv %s144
    %v146 = vadd.f32 %v139, %v145
    %vm147 = vcmask 122880
    %148 = vst.msk [vmem:[#allocation3] sm:$0x1] %vm147, %v146
    // Predicated region
    $region22: #{calibrated_forward.1} parent=1 // pred_check
      _
    $region23: #{calibrated_forward.1} parent=1 // pred_check_branch
      %150 = sbr.rel (0) target = $region25
    $region24: #{calibrated_forward.1} parent=1 // pred_region
      %s152 = ssub.s32 16, 16
      %153 = vsyncadd [#allocation4], %s152
      %s155 = sshll.u32 [#allocation3], 4
      %s156 = int_to_ptr.vmem [resolvable:$true] %s155
      %158 = dma.vmem_to_hbm [thread:$0]  %s156, 16, %s5, [#allocation4]
    $region25: #{calibrated_forward.1} parent=1 // pred_fallthru
      _
    // Predicated region
    $region26: #{calibrated_forward.1} parent=1 // pred_check
      _
    $region27: #{calibrated_forward.1} parent=1 // pred_check_branch
      %160 = sbr.rel (0) target = $region29
    $region28: #{calibrated_forward.1} parent=1 // pred_region
      %161 = dma.done [#allocation4], 16
    $region29: #{calibrated_forward.1} parent=1 // pred_fallthru
      _
    %162 = vsyncpa [#allocation4], 1

</llo_original>
